<compile_context>
chip_gen: v5e
topology: v5e:2x2
jax: 0.10.0
libtpu: 0.0.40
codegen_flags: <defaults>
</compile_context>

<pallas_src>
import jax
import jax.numpy as jnp
from jax.experimental import pallas as pl
from jax.experimental.pallas import tpu as pltpu

_LANE = 128
_MAX_TILE_ROWS = 2048      # (2048, 128) f32 tile = 1 MiB per input per buffer


def _round_up(x, m):
    return ((x + m - 1) // m) * m


def _fm_kernel(a_ref, b_ref, w_ref, o_ref, acc_ref):
    """Accumulate sum(w * |a - b|) over the reduction axis (grid axis 1)."""
    s = pl.program_id(1)

    @pl.when(s == 0)
    def _():
        acc_ref[...] = jnp.zeros_like(acc_ref)

    a = a_ref[...].astype(jnp.float32)
    b = b_ref[...].astype(jnp.float32)
    # (tile_rows, 1) weight lane-broadcasts against the (tile_rows, 128) tile.
    acc_ref[...] += jnp.abs(a - b) * w_ref[...]

    # Single cross-lane reduce + (1,1) store, only once per core at the end.
    @pl.when(s == pl.num_programs(1) - 1)
    def _():
        o_ref[...] = jnp.sum(acc_ref[...]).reshape(1, 1)


def _fused_weighted_abs_sum(a2d, b2d, w2d, num_splits, tile_rows):
    rows = a2d.shape[0]
    steps = rows // (num_splits * tile_rows)

    def data_map(c, s):
        return (c * steps + s, 0)

    partials = pl.pallas_call(
        _fm_kernel,
        out_shape=jax.ShapeDtypeStruct((num_splits, 1), jnp.float32),
        grid=(num_splits, steps),
        in_specs=[
            pl.BlockSpec((tile_rows, _LANE), data_map),
            pl.BlockSpec((tile_rows, _LANE), data_map),
            pl.BlockSpec((tile_rows, 1), data_map),
        ],
        out_specs=pl.BlockSpec((1, 1), lambda c, s: (c, 0)),
        scratch_shapes=[pltpu.VMEM((tile_rows, _LANE), jnp.float32)],
        compiler_params=pltpu.CompilerParams(
            # leading axis split across TensorCores (v7x); trailing axis is the
            # sequential reduction.  Footprint (~5 MiB) fits every generation's
            # default scoped VMEM, so no explicit vmem_limit_bytes needed.
            dimension_semantics=("parallel", "arbitrary")),
    )(a2d, b2d, w2d)
    return jnp.sum(partials)


def feature_match_loss(feats_hat, feats, *, average_by_layers=True,
                       average_by_discriminators=True,
                       include_final_outputs=False):
    """JAX/Pallas port of FeatureMatchLoss.forward (single fused kernel call)."""
    # ---- gather every (hat, ref, per-layer weight) pair ---------------------
    pairs = []
    num_disc = 0
    for i, (fh_d, f_d) in enumerate(zip(feats_hat, feats)):
        num_disc = i + 1
        if not include_final_outputs:
            fh_d = fh_d[:-1]
            f_d = f_d[:-1]
        layer_pairs = list(zip(fh_d, f_d))
        layer_div = len(layer_pairs) if average_by_layers else 1
        for fh, f in layer_pairs:
            pairs.append((fh, f, layer_div))
    if not pairs:
        return jnp.float32(0.0)
    disc_div = num_disc if average_by_discriminators else 1

    # Common streaming dtype: keep the inputs' native dtype (bf16 stays bf16).
    dtype = jnp.result_type(*([p[0].dtype for p in pairs] +
                              [p[1].dtype for p in pairs]))

    a_chunks, b_chunks, w_chunks = [], [], []
    total_rows = 0
    for fh, f, layer_div in pairs:
        f = jax.lax.stop_gradient(f)              # == feat_.detach()
        numel = fh.size
        # Per-element weight folds the layer mean and both averaging flags, so
        # the kernel only needs one weighted sum over everything.
        w = 1.0 / (float(numel) * float(layer_div) * float(disc_div))
        a = fh.reshape(-1).astype(dtype)
        b = f.reshape(-1).astype(dtype)
        rows = -(-numel // _LANE)
        pad = rows * _LANE - numel
        if pad:                                   # identical zero pad -> |a-b|=0
            a = jnp.pad(a, (0, pad))
            b = jnp.pad(b, (0, pad))
        a_chunks.append(a)
        b_chunks.append(b)
        w_chunks.append(jnp.full((rows,), w, dtype=jnp.float32))
        total_rows += rows

    # ---- tiling: large tiles; 2-way core split only for large inputs --------
    num_splits = 2 if total_rows >= 2 * _MAX_TILE_ROWS else 1
    tile_rows = min(_MAX_TILE_ROWS,
                    _round_up(-(-total_rows // num_splits), 16))
    padded_rows = _round_up(total_rows, num_splits * tile_rows)
    tail = padded_rows - total_rows
    if tail:                                      # pad only the final chunk
        a_chunks.append(jnp.zeros((tail * _LANE,), dtype))
        b_chunks.append(jnp.zeros((tail * _LANE,), dtype))
        w_chunks.append(jnp.zeros((tail,), jnp.float32))

    a2d = jnp.concatenate(a_chunks).reshape(padded_rows, _LANE)
    b2d = jnp.concatenate(b_chunks).reshape(padded_rows, _LANE)
    w2d = jnp.concatenate(w_chunks).reshape(padded_rows, 1)

    return _fused_weighted_abs_sum(a2d, b2d, w2d, num_splits, tile_rows)


def _reference(feats_hat, feats, average_by_layers=True,
               average_by_discriminators=True, include_final_outputs=False):
    """Pure-JAX reference mirroring the PyTorch module exactly."""
    feat_match_loss = 0.0
    i = 0
    for i, (fh_d, f_d) in enumerate(zip(feats_hat, feats)):
        loss_d = 0.0
        if not include_final_outputs:
            fh_d = fh_d[:-1]
            f_d = f_d[:-1]
        j = 0
        for j, (fh, f) in enumerate(zip(fh_d, f_d)):
            loss_d = loss_d + jnp.mean(jnp.abs(fh.astype(jnp.float32) -
                                               f.astype(jnp.float32)))
        if average_by_layers:
            loss_d = loss_d / (j + 1)
        feat_match_loss = feat_match_loss + loss_d
    if average_by_discriminators:
        feat_match_loss = feat_match_loss / (i + 1)
    return feat_match_loss


if __name__ == "__main__":
    key = jax.random.PRNGKey(0)
    keys = iter(jax.random.split(key, 64))

    def rand(shape):
        return jax.random.normal(next(keys), shape, dtype=jnp.float32)

    # 3 discriminators (list-of-list); the last tensor of each inner list is
    # the final classification output (dropped unless include_final_outputs).
    shapes = [
        [(2, 4, 64), (2, 8, 32), (2, 16, 16), (2, 1, 16)],
        [(2, 4, 16, 8), (2, 8, 8, 8), (2, 1, 32)],
        [(2, 4, 128), (2, 8, 64), (2, 1, 64)],
    ]
    feats_hat = [[rand(s) for s in d] for d in shapes]
    feats = [[rand(s) for s in d] for d in shapes]

    # Default flags (average by layers & discriminators, exclude final outputs).
    loss = feature_match_loss(feats_hat, feats)
    loss = jax.block_until_ready(loss)
    ref = _reference(feats_hat, feats)
    assert jnp.allclose(loss, ref, rtol=1e-5, atol=1e-5), (loss, ref)

    # Variant: include final outputs, no layer averaging.
    loss2 = feature_match_loss(feats_hat, feats,
                               average_by_layers=False,
                               include_final_outputs=True)
    loss2 = jax.block_until_ready(loss2)
    ref2 = _reference(feats_hat, feats,
                      average_by_layers=False, include_final_outputs=True)
    assert jnp.allclose(loss2, ref2, rtol=1e-5, atol=1e-5), (loss2, ref2)

    print("KERNEL_OK")
</pallas_src>

<mosaic_0001>
module attributes {stable_mosaic.version = 11 : i64} {
  func.func @_fm_kernel(%arg0: i32, %arg1: i32, %arg2: memref<48x128xf32, #tpu.memory_space<vmem>>, %arg3: memref<48x128xf32, #tpu.memory_space<vmem>>, %arg4: memref<48x1xf32, #tpu.memory_space<vmem>>, %arg5: memref<1x1xf32, #tpu.memory_space<vmem>>, %arg6: memref<48x128xf32, #tpu.memory_space<vmem>>) attributes {dimension_semantics = [#tpu.dimension_semantics<parallel>, #tpu.dimension_semantics<arbitrary>], iteration_bounds = array<i64: 1, 1>, scalar_prefetch = 0 : i64, scratch_operands = 1 : i64, tpu.core_type = #tpu.core_type<tc>, window_params = [{transform_indices = @transform_0, window_bounds = array<i64: 48, 128>}, {transform_indices = @transform_1, window_bounds = array<i64: 48, 128>}, {transform_indices = @transform_2, window_bounds = array<i64: 48, 1>}, {transform_indices = @transform_3, window_bounds = array<i64: 1, 1>}]} {
    %c0_i32 = arith.constant 0 : i32
    %0 = arith.cmpi eq, %arg1, %c0_i32 : i32
    %1 = arith.extui %0 : i1 to i32
    %c0_i32_0 = arith.constant 0 : i32
    %2 = arith.cmpi ne, %1, %c0_i32_0 : i32
    scf.if %2 {
      %cst = arith.constant 0.000000e+00 : f32
      %16 = vector.broadcast %cst : f32 to vector<48x128xf32>
      %c0_12 = arith.constant 0 : index
      %c0_13 = arith.constant 0 : index
      %17 = vector.load %arg6[%c0_12, %c0_13] : memref<48x128xf32, #tpu.memory_space<vmem>>, vector<48x128xf32>
      tpu.vector_store %arg6[%c0_12, %c0_13], %16 {strides = array<i32>} : memref<48x128xf32, #tpu.memory_space<vmem>>, vector<48x128xf32>,
    } else {
    }
    %c0 = arith.constant 0 : index
    %c0_1 = arith.constant 0 : index
    %3 = vector.load %arg2[%c0, %c0_1] : memref<48x128xf32, #tpu.memory_space<vmem>>, vector<48x128xf32>
    %c0_2 = arith.constant 0 : index
    %c0_3 = arith.constant 0 : index
    %4 = vector.load %arg3[%c0_2, %c0_3] : memref<48x128xf32, #tpu.memory_space<vmem>>, vector<48x128xf32>
    %c0_4 = arith.constant 0 : index
    %c0_5 = arith.constant 0 : index
    %5 = vector.load %arg6[%c0_4, %c0_5] : memref<48x128xf32, #tpu.memory_space<vmem>>, vector<48x128xf32>
    %6 = arith.subf %3, %4 : vector<48x128xf32>
    %7 = math.absf %6 : vector<48x128xf32>
    %c0_6 = arith.constant 0 : index
    %c0_7 = arith.constant 0 : index
    %8 = vector.load %arg4[%c0_6, %c0_7] : memref<48x1xf32, #tpu.memory_space<vmem>>, vector<48x1xf32>
    %9 = vector.broadcast %8 : vector<48x1xf32> to vector<48x128xf32>
    %10 = arith.mulf %7, %9 : vector<48x128xf32>
    %11 = arith.addf %5, %10 : vector<48x128xf32>
    %c0_8 = arith.constant 0 : index
    %c0_9 = arith.constant 0 : index
    %12 = vector.load %arg6[%c0_8, %c0_9] : memref<48x128xf32, #tpu.memory_space<vmem>>, vector<48x128xf32>
    tpu.vector_store %arg6[%c0_8, %c0_9], %11 {strides = array<i32>} : memref<48x128xf32, #tpu.memory_space<vmem>>, vector<48x128xf32>,
    %c0_i32_10 = arith.constant 0 : i32
    %13 = arith.cmpi eq, %arg1, %c0_i32_10 : i32
    %14 = arith.extui %13 : i1 to i32
    %c0_i32_11 = arith.constant 0 : i32
    %15 = arith.cmpi ne, %14, %c0_i32_11 : i32
    scf.if %15 {
      %c0_12 = arith.constant 0 : index
      %c0_13 = arith.constant 0 : index
      %16 = vector.load %arg6[%c0_12, %c0_13] : memref<48x128xf32, #tpu.memory_space<vmem>>, vector<48x128xf32>
      %17 = vector.shape_cast %16 : vector<48x128xf32> to vector<1x48x128xf32>
      %cst = arith.constant dense<0.000000e+00> : vector<1xf32>
      %18 = vector.multi_reduction <add>, %17, %cst [1, 2] : vector<1x48x128xf32> to vector<1xf32>
      %19 = vector.shape_cast %18 : vector<1xf32> to vector<1x1x1xf32>
      %20 = vector.extract %19[0, 0, 0] : f32 from vector<1x1x1xf32>
      %21 = vector.broadcast %20 : f32 to vector<1x1xf32>
      %c0_14 = arith.constant 0 : index
      %c0_15 = arith.constant 0 : index
      %22 = vector.load %arg5[%c0_14, %c0_15] : memref<1x1xf32, #tpu.memory_space<vmem>>, vector<1x1xf32>
      tpu.vector_store %arg5[%c0_14, %c0_15], %21 {strides = array<i32>} : memref<1x1xf32, #tpu.memory_space<vmem>>, vector<1x1xf32>,
    } else {
    }
    return
  }
  func.func @transform_0(%arg0: i32, %arg1: i32) -> (i32, i32) {
    %c1_i32 = arith.constant 1 : i32
    %0 = arith.muli %arg0, %c1_i32 : i32
    %1 = arith.addi %0, %arg1 : i32
    %c0_i32 = arith.constant 0 : i32
    %c0_i32_0 = arith.constant 0 : i32
    return %1, %c0_i32 : i32, i32
  }
  func.func @transform_1(%arg0: i32, %arg1: i32) -> (i32, i32) {
    %c1_i32 = arith.constant 1 : i32
    %0 = arith.muli %arg0, %c1_i32 : i32
    %1 = arith.addi %0, %arg1 : i32
    %c0_i32 = arith.constant 0 : i32
    %c0_i32_0 = arith.constant 0 : i32
    return %1, %c0_i32 : i32, i32
  }
  func.func @transform_2(%arg0: i32, %arg1: i32) -> (i32, i32) {
    %c1_i32 = arith.constant 1 : i32
    %0 = arith.muli %arg0, %c1_i32 : i32
    %1 = arith.addi %0, %arg1 : i32
    %c0_i32 = arith.constant 0 : i32
    %c0_i32_0 = arith.constant 0 : i32
    return %1, %c0_i32 : i32, i32
  }
  func.func @transform_3(%arg0: i32, %arg1: i32) -> (i32, i32) {
    %c0_i32 = arith.constant 0 : i32
    %c0_i32_0 = arith.constant 0 : i32
    return %arg0, %c0_i32 : i32, i32
  }
}

</mosaic_0001>

<llo_original>
// kernel: tpu_custom_call.1
$region0: #{tpu_custom_call.1}
  #allocation0 [shape = 'u32[]', space=smem, size = 0x4, offset = 0x4, fixed_abs, tag = 'smem constant byte address 0x4 - core index']
  #allocation1 [shape = 'u32[72,128]{1,0:T(1,128)}', space=vmem, size = 0x9000, scoped, tag = 'internal scratch']
  #allocation2 [shape = 'f32[48,128]{1,0:T(8,128)}', space=vmem, size = 0x6000, scoped, tag = 'scratch operand']
  %s0 = inlined_call_operand.vmem [shape: f32[48,128], index: 0, kind: input, shape index: {}]
  %s1 = inlined_call_operand.hbm [shape: f32[48,128], index: 1, kind: input, shape index: {}]
  %s2 = inlined_call_operand.vmem [shape: f32[48,1], index: 2, kind: input, shape index: {}]
  %s3 = inlined_call_operand.hbm [shape: f32[1,1], index: 3, kind: output, shape index: {}]
  %s4 = sld [smem:[#allocation0]]
  $region34: #{tpu_custom_call.1} parent=0
    _
  %s6 = ssub.s32 1, %s4
  %s7 = scalar_select 0, %s6, %s4
  $region1: #{tpu_custom_call.1} parent=0
    #allocation3 [shape = 'u8[24576]{0}', space=vmem, size = 0x6000, scoped, tag = 'input window, operand 1, single buffered']
    #allocation4 [shape = 's32[1]{0}', space=sflag, size = 0x4, scoped, tag = 'scoped memory for tpu_custom_call.1']
    #allocation5 [shape = 's32[1]{0}', space=sflag, size = 0x4, scoped, tag = 'scoped memory for tpu_custom_call.1']
    #allocation6 [shape = 'u8[512]{0}', space=vmem, size = 0x400, scoped, tag = 'output window, operand 0, single buffered']
    %8 = vsyncpa [#allocation4], 0
    %9 = vsyncpa [#allocation5], 0
    // Predicated region
    $region2: #{tpu_custom_call.1} parent=1 // pred_check
      _
    $region3: #{tpu_custom_call.1} parent=1 // pred_check_branch
      %11 = sbr.rel (0) target = $region5
    $region4: #{tpu_custom_call.1} parent=1 // pred_region
      %s12 = sadd.s32 0, 0
      %s13 = smul.u32 6, %s12
      %p14 = scmp.lt.s32.totalorder %s13, 5
      %s15 = scalar_select %p14, %s13, 5
      %s16 = smul.addr %s15, 8
      %s17 = scalar_lea.vmem %s0, %s16
      %s18 = sadd.s32 0, 0
      %s19 = smul.u32 6, %s18
    $region5: #{tpu_custom_call.1} parent=1 // pred_fallthru
      _
    // Predicated region
    $region6: #{tpu_custom_call.1} parent=1 // pred_check
      _
    $region7: #{tpu_custom_call.1} parent=1 // pred_check_branch
      %21 = sbr.rel (0) target = $region9
    $region8: #{tpu_custom_call.1} parent=1 // pred_region
      %s22 = sadd.s32 0, 0
      %s23 = smul.u32 6, %s22
      %25 = vsyncadd [#allocation4], 0
      %s26 = smul.addr %s23, 8
      %s27 = scalar_lea.hbm %s1, %s26
      %s28 = sshll.u32 %s27, 4
      %s29 = int_to_ptr.hbm [resolvable:$true] %s28
      %s30 = sshll.u32 [#allocation3], 4
      %s31 = int_to_ptr.vmem [resolvable:$true] %s30
      %36 = dma.hbm_to_vmem [thread:$0]  %s29, 768, %s31, [#allocation4], 128, 128, 8
    $region9: #{tpu_custom_call.1} parent=1 // pred_fallthru
      _
    // Predicated region
    $region10: #{tpu_custom_call.1} parent=1 // pred_check
      _
    $region11: #{tpu_custom_call.1} parent=1 // pred_check_branch
      %38 = sbr.rel (0) target = $region13
    $region12: #{tpu_custom_call.1} parent=1 // pred_region
      %s39 = sadd.s32 0, 0
      %s40 = smul.u32 6, %s39
      %p41 = scmp.lt.s32.totalorder %s40, 5
      %s42 = scalar_select %p41, %s40, 5
      %s43 = smul.addr %s42, 8
      %s44 = scalar_lea.vmem %s2, %s43
      %s45 = sadd.s32 0, 0
      %s46 = smul.u32 6, %s45
    $region13: #{tpu_custom_call.1} parent=1 // pred_fallthru
      _
    // Predicated region
    $region14: #{tpu_custom_call.1} parent=1 // pred_check
      _
    $region15: #{tpu_custom_call.1} parent=1 // pred_check_branch
      %48 = sbr.rel (0) target = $region17
    $region16: #{tpu_custom_call.1} parent=1 // pred_region
      %50 = dma.done [#allocation4], 768
    $region17: #{tpu_custom_call.1} parent=1 // pred_fallthru
      _
    %s51 = sadd.s32 0, 0
    %s52 = smul.u32 6, %s51
    %p53 = scmp.lt.s32.totalorder %s52, 5
    %s54 = scalar_select %p53, %s52, 5
    %s55 = smul.addr %s54, 8
    %s56 = scalar_lea.vmem %s0, %s55
    %s57 = sadd.s32 0, 0
    %s58 = smul.u32 6, %s57
    %p59 = scmp.lt.s32.totalorder %s58, 5
    %s60 = scalar_select %p59, %s58, 5
    %s61 = smul.addr %s60, 8
    %s62 = scalar_lea.vmem %s2, %s61
    %s63 = sadd.s32 0, 0
    %s64 = smul.u32 6, %s63
    %p65 = scmp.lt.s32.totalorder %s64, 5
    %s66 = scalar_select %p65, %s64, 5
    %s67 = smul.addr %s66, 8
    %s68 = scalar_lea.vmem %s0, %s67
    %s69 = sadd.s32 0, 0
    %s70 = smul.u32 6, %s69
    %s71 = sadd.s32 0, 0
    %s72 = smul.u32 6, %s71
    %s73 = sadd.s32 0, 0
    %s74 = smul.u32 6, %s73
    %p75 = scmp.lt.s32.totalorder %s74, 5
    %s76 = scalar_select %p75, %s74, 5
    %s77 = smul.addr %s76, 8
    %s78 = scalar_lea.vmem %s2, %s77
    %s79 = sadd.s32 0, 0
    %s80 = smul.u32 6, %s79
    %p81 = scmp.eq.s32.totalorder 0, 0
    // Predicated region
    $region18: #{tpu_custom_call.1} parent=1 // pred_check
      %p82 = pneg %p81
    $region19: #{tpu_custom_call.1} parent=1 // pred_check_branch
      %84 = sbr.rel (%p82) target = $region21
    $region20: #{tpu_custom_call.1} parent=1 // pred_region
      %85 = vst [vmem:[#allocation2] sm:$0xff] 0.0
      %86 = vst [vmem:[#allocation2 + $0x8] sm:$0xff] 0.0
      %87 = vst [vmem:[#allocation2 + $0x10] sm:$0xff] 0.0
      %88 = vst [vmem:[#allocation2 + $0x18] sm:$0xff] 0.0
      %89 = vst [vmem:[#allocation2 + $0x20] sm:$0xff] 0.0
      %90 = vst [vmem:[#allocation2 + $0x28] sm:$0xff] 0.0
    $region21: #{tpu_custom_call.1} parent=1 // pred_fallthru
      _
    %v91 = vld [vmem:[%s68] sm:$0xff]
    %v92 = vld [vmem:[%s68 + $0x8] sm:$0xff]
    %v93 = vld [vmem:[%s68 + $0x10] sm:$0xff]
    %v94 = vld [vmem:[%s68 + $0x18] sm:$0xff]
    %v95 = vld [vmem:[%s68 + $0x20] sm:$0xff]
    %v96 = vld [vmem:[%s68 + $0x28] sm:$0xff]
    %v97 = vld [vmem:[#allocation3] sm:$0xff]
    %v98 = vld [vmem:[#allocation3 + $0x8] sm:$0xff]
    %v99 = vld [vmem:[#allocation3 + $0x10] sm:$0xff]
    %v100 = vld [vmem:[#allocation3 + $0x18] sm:$0xff]
    %v101 = vld [vmem:[#allocation3 + $0x20] sm:$0xff]
    %v102 = vld [vmem:[#allocation3 + $0x28] sm:$0xff]
    %v103 = vld [vmem:[#allocation2] sm:$0xff]
    %v104 = vld [vmem:[#allocation2 + $0x8] sm:$0xff]
    %v105 = vld [vmem:[#allocation2 + $0x10] sm:$0xff]
    %v106 = vld [vmem:[#allocation2 + $0x18] sm:$0xff]
    %v107 = vld [vmem:[#allocation2 + $0x20] sm:$0xff]
    %v108 = vld [vmem:[#allocation2 + $0x28] sm:$0xff]
    %v109 = vsub.f32 %v91, %v97
    %v110 = vsub.f32 %v92, %v98
    %v111 = vsub.f32 %v93, %v99
    %v112 = vsub.f32 %v94, %v100
    %v113 = vsub.f32 %v95, %v101
    %v114 = vsub.f32 %v96, %v102
    %v115 = vand.u32 2147483647, %v109
    %v116 = vand.u32 2147483647, %v110
    %v117 = vand.u32 2147483647, %v111
    %v118 = vand.u32 2147483647, %v112
    %v119 = vand.u32 2147483647, %v113
    %v120 = vand.u32 2147483647, %v114
    %v121 = vld [vmem:[%s78] sm:$0xff]
    %v122 = vld [vmem:[%s78 + $0x8] sm:$0xff]
    %v123 = vld [vmem:[%s78 + $0x10] sm:$0xff]
    %v124 = vld [vmem:[%s78 + $0x18] sm:$0xff]
    %v125 = vld [vmem:[%s78 + $0x20] sm:$0xff]
    %v126 = vld [vmem:[%s78 + $0x28] sm:$0xff]
    %128 = vset.pattern.permute.xlu0 0
    %129 = vperm.xlu0 %128, %v121
    %v130 = vpop.permute.xlu0 %129
    %133 = vset.pattern.permute.xlu0 0
    %134 = vperm.xlu0 %133, %v122
    %v135 = vpop.permute.xlu0 %134
    %138 = vset.pattern.permute.xlu0 0
    %139 = vperm.xlu0 %138, %v123
    %v140 = vpop.permute.xlu0 %139
    %143 = vset.pattern.permute.xlu0 0
    %144 = vperm.xlu0 %143, %v124
    %v145 = vpop.permute.xlu0 %144
    %148 = vset.pattern.permute.xlu0 0
    %149 = vperm.xlu0 %148, %v125
    %v150 = vpop.permute.xlu0 %149
    %153 = vset.pattern.permute.xlu0 0
    %154 = vperm.xlu0 %153, %v126
    %v155 = vpop.permute.xlu0 %154
    %v157 = vmul.f32 %v115, %v130
    %v158 = vmul.f32 %v116, %v135
    %v159 = vmul.f32 %v117, %v140
    %v160 = vmul.f32 %v118, %v145
    %v161 = vmul.f32 %v119, %v150
    %v162 = vmul.f32 %v120, %v155
    %v163 = vadd.f32 %v103, %v157
    %v164 = vadd.f32 %v104, %v158
    %v165 = vadd.f32 %v105, %v159
    %v166 = vadd.f32 %v106, %v160
    %v167 = vadd.f32 %v107, %v161
    %v168 = vadd.f32 %v108, %v162
    %169 = vst [vmem:[#allocation2] sm:$0xff] %v163
    %170 = vst [vmem:[#allocation2 + $0x8] sm:$0xff] %v164
    %171 = vst [vmem:[#allocation2 + $0x10] sm:$0xff] %v165
    %172 = vst [vmem:[#allocation2 + $0x18] sm:$0xff] %v166
    %173 = vst [vmem:[#allocation2 + $0x20] sm:$0xff] %v167
    %174 = vst [vmem:[#allocation2 + $0x28] sm:$0xff] %v168
    // Predicated region
    $region22: #{tpu_custom_call.1} parent=1 // pred_check
      %p175 = pneg %p81
    $region23: #{tpu_custom_call.1} parent=1 // pred_check_branch
      %177 = sbr.rel (%p175) target = $region25
    $region24: #{tpu_custom_call.1} parent=1 // pred_region
      %v178 = vld [vmem:[#allocation2] sm:$0xff]
      %v179 = vld [vmem:[#allocation2 + $0x8] sm:$0xff]
      %v180 = vld [vmem:[#allocation2 + $0x10] sm:$0xff]
      %v181 = vld [vmem:[#allocation2 + $0x18] sm:$0xff]
      %v182 = vld [vmem:[#allocation2 + $0x20] sm:$0xff]
      %v183 = vld [vmem:[#allocation2 + $0x28] sm:$0xff]
      %v184 = vadd.f32 %v178, %v179
      %v185 = vadd.f32 %v184, %v180
      %v186 = vadd.f32 %v185, %v181
      %v187 = vadd.f32 %v186, %v182
      %v188 = vadd.f32 %v187, %v183
      %189 = vadd.xlane.f32.xlu0 %v188
      %v190 = vpop.xlane.xlu0 %189
      %v191 = vrot.slane %v190, 4
      %v192 = vadd.f32 %v190, %v191
      %v193 = vrot.slane %v192, 2
      %v194 = vadd.f32 %v192, %v193
      %v195 = vrot.slane %v194, 1
      %v196 = vadd.f32 %v194, %v195
      %s197 = vtos %v196
      %v198 = vstv %s197
      %vm199 = vcmask 0
      %200 = vst.msk [vmem:[#allocation6] sm:$0x1] %vm199, %v198
    $region25: #{tpu_custom_call.1} parent=1 // pred_fallthru
      _
    // Predicated region
    $region26: #{tpu_custom_call.1} parent=1 // pred_check
      _
    $region27: #{tpu_custom_call.1} parent=1 // pred_check_branch
      %202 = sbr.rel (0) target = $region29
    $region28: #{tpu_custom_call.1} parent=1 // pred_region
      %204 = vsyncadd [#allocation5], 0
      %s206 = sshll.u32 [#allocation6], 4
      %s207 = int_to_ptr.vmem [resolvable:$true] %s206
      %s208 = sshll.u32 %s3, 4
      %s209 = int_to_ptr.hbm [resolvable:$true] %s208
      %211 = dma.vmem_to_hbm [thread:$0]  %s207, 16, %s209, [#allocation5]
    $region29: #{tpu_custom_call.1} parent=1 // pred_fallthru
      _
    // Predicated region
    $region30: #{tpu_custom_call.1} parent=1 // pred_check
      _
    $region31: #{tpu_custom_call.1} parent=1 // pred_check_branch
      %213 = sbr.rel (0) target = $region33
    $region32: #{tpu_custom_call.1} parent=1 // pred_region
      %215 = dma.done [#allocation5], 16
    $region33: #{tpu_custom_call.1} parent=1 // pred_fallthru
      _
    %216 = vsyncpa [#allocation4], 1
    %217 = vsyncpa [#allocation5], 1

</llo_original>
